<compile_context>
chip_gen: v7x
topology: tpu7x:2x2x1
jax: 0.10.0
libtpu: 0.0.40
codegen_flags: <defaults>
</compile_context>

<pallas_src>
import jax
import jax.numpy as jnp
from jax.experimental import pallas as pl
from jax.experimental.pallas import tpu as pltpu


def _consistency_kernel(in_ref, tgt_ref, out_ref):
    # Block shape: (Bn, C, S_TILE, 128). Softmax over axis=1 (channels).
    x = in_ref[...].astype(jnp.float32)
    y = tgt_ref[...].astype(jnp.float32)

    # Numerically stable softmax over the channel axis (exact division:
    # it rides the otherwise-idle EUP/VPU slots of this memory-bound kernel).
    x = x - jnp.max(x, axis=1, keepdims=True)
    x_exp = jnp.exp(x)
    x_sm = x_exp / jnp.sum(x_exp, axis=1, keepdims=True)

    y = y - jnp.max(y, axis=1, keepdims=True)
    y_exp = jnp.exp(y)
    y_sm = y_exp / jnp.sum(y_exp, axis=1, keepdims=True)

    d = x_sm - y_sm
    out_ref[...] = (d * d).astype(out_ref.dtype)


def _round_up(x, m):
    return (x + m - 1) // m * m


def _vmem_budget_bytes():
    # Generation-aware budget: ~3/4 of physical VMEM
    # (v7x: 64 MiB -> 48 MiB; v5e/v6e: 128 MiB -> 96 MiB).
    try:
        cap = int(pltpu.get_tpu_info().vmem_capacity_bytes)
    except Exception:
        cap = 64 * 1024 * 1024  # conservative fallback (v7x per-TC size)
    return (3 * cap) // 4


@jax.jit
def consistency_loss(input_logits, target_logits):
    """Pallas implementation of ConsistencyLoss.forward.

    Args:
      input_logits, target_logits: float arrays of shape (N, C, H, W) (NCHW).
        Any float dtype (f32/bf16); output matches the input dtype.
    Returns:
      (N, C, H, W) array of elementwise squared softmax differences.
    """
    assert input_logits.shape == target_logits.shape
    assert input_logits.dtype == target_logits.dtype
    N, C, H, W = input_logits.shape
    HW = H * W
    dtype = input_logits.dtype
    itemsize = jnp.dtype(dtype).itemsize

    # Lane-dense layout with spatial on (sublane, lane): (N, C, S, 128).
    # The reshape is metadata-only when HW % 128 == 0 (the common case).
    HW_pad = _round_up(HW, 128)
    S = HW_pad // 128

    x = input_logits.reshape(N, C, HW)
    y = target_logits.reshape(N, C, HW)
    if HW_pad != HW:
        # Rare: at most 127 padded columns; softmax is per-column so valid
        # columns are exact and the pad is sliced away below.
        pad = ((0, 0), (0, 0), (0, HW_pad - HW))
        x = jnp.pad(x, pad)
        y = jnp.pad(y, pad)
    x = x.reshape(N, C, S, 128)
    y = y.reshape(N, C, S, 128)

    # Block sizing: 3 I/O arrays x 2 pipeline buffers (I/O dtype) plus ~10 live
    # f32 (block-sized) intermediates.  Exact for this layout (no sublane pad).
    budget = _vmem_budget_bytes()
    per_elem_bytes = 3 * 2 * itemsize + 10 * 4
    max_block_elems = max(1, budget // per_elem_bytes)
    max_cols = max(1, max_block_elems // (C * 128))  # budget for Bn * S_TILE

    sub = max(8, 32 // itemsize)  # sublane multiple: 8 for f32, 16 for bf16
    if S <= max_cols:
        # Whole image fits: batch-block so small images still move ~MiB/step.
        s_tile = S
        bn = max(1, min(N, max_cols // S))
    else:
        bn = 1
        s_tile = min(S, max(sub, (max_cols // sub) * sub))

    grid = (pl.cdiv(N, bn), pl.cdiv(S, s_tile))
    block = pl.BlockSpec((bn, C, s_tile, 128), lambda n, s: (n, 0, s, 0))

    block_elems = bn * C * s_tile * 128
    vmem_est = per_elem_bytes * block_elems
    vmem_limit = int(min(budget, max(vmem_est, 16 * 1024 * 1024)))

    cost = pl.CostEstimate(
        flops=10 * N * C * HW_pad,
        transcendentals=2 * N * C * HW_pad,
        bytes_accessed=3 * N * C * HW_pad * itemsize,
    )

    out = pl.pallas_call(
        _consistency_kernel,
        out_shape=jax.ShapeDtypeStruct((N, C, S, 128), dtype),
        grid_spec=pltpu.PrefetchScalarGridSpec(
            num_scalar_prefetch=0,
            grid=grid,
            in_specs=[block, block],
            out_specs=block,
        ),
        compiler_params=pltpu.CompilerParams(
            dimension_semantics=("parallel", "parallel"),
            vmem_limit_bytes=vmem_limit,
        ),
        cost_estimate=cost,
    )(x, y)

    out = out.reshape(N, C, HW_pad)
    if HW_pad != HW:
        out = out[:, :, :HW]
    return out.reshape(N, C, H, W)


if __name__ == "__main__":
    key = jax.random.PRNGKey(0)
    k1, k2 = jax.random.split(key)

    N, C, H, W = 2, 4, 16, 16
    input_logits = jax.random.normal(k1, (N, C, H, W), dtype=jnp.float32)
    target_logits = jax.random.normal(k2, (N, C, H, W), dtype=jnp.float32)

    # f32 path (exact division inside kernel -> tight tolerance).
    out = jax.block_until_ready(consistency_loss(input_logits, target_logits))
    ref = (jax.nn.softmax(input_logits, axis=1)
           - jax.nn.softmax(target_logits, axis=1)) ** 2
    assert out.shape == (N, C, H, W)
    assert out.dtype == input_logits.dtype
    assert jnp.allclose(out, ref, atol=1e-6, rtol=1e-5), "f32 mismatch vs reference"

    # bf16 end-to-end (halves HBM traffic; kernel math stays f32 internally).
    x_bf16 = input_logits.astype(jnp.bfloat16)
    y_bf16 = target_logits.astype(jnp.bfloat16)
    out_bf16 = jax.block_until_ready(consistency_loss(x_bf16, y_bf16))
    ref_bf16 = (jax.nn.softmax(x_bf16.astype(jnp.float32), axis=1)
                - jax.nn.softmax(y_bf16.astype(jnp.float32), axis=1)) ** 2
    assert out_bf16.dtype == jnp.bfloat16
    assert jnp.allclose(out_bf16.astype(jnp.float32), ref_bf16,
                        atol=4e-3, rtol=5e-2), "bf16 mismatch vs reference"

    print("KERNEL_OK")
</pallas_src>

<mosaic_0001>
module attributes {stable_mosaic.version = 11 : i64} {
  func.func @_consistency_kernel(%arg0: i32, %arg1: i32, %arg2: memref<2x4x2x128xf32, #tpu.memory_space<vmem>>, %arg3: memref<2x4x2x128xf32, #tpu.memory_space<vmem>>, %arg4: memref<2x4x2x128xf32, #tpu.memory_space<vmem>>) attributes {dimension_semantics = [#tpu.dimension_semantics<parallel>, #tpu.dimension_semantics<parallel>], iteration_bounds = array<i64: 1, 1>, scalar_prefetch = 0 : i64, scratch_operands = 0 : i64, tpu.core_type = #tpu.core_type<tc>, window_params = [{transform_indices = @transform_0, window_bounds = array<i64: 2, 4, 2, 128>}, {transform_indices = @transform_1, window_bounds = array<i64: 2, 4, 2, 128>}, {transform_indices = @transform_2, window_bounds = array<i64: 2, 4, 2, 128>}]} {
    %c0 = arith.constant 0 : index
    %c0_0 = arith.constant 0 : index
    %c0_1 = arith.constant 0 : index
    %c0_2 = arith.constant 0 : index
    %0 = vector.load %arg2[%c0, %c0_0, %c0_1, %c0_2] : memref<2x4x2x128xf32, #tpu.memory_space<vmem>>, vector<2x4x2x128xf32>
    %c0_3 = arith.constant 0 : index
    %c0_4 = arith.constant 0 : index
    %c0_5 = arith.constant 0 : index
    %c0_6 = arith.constant 0 : index
    %1 = vector.load %arg3[%c0_3, %c0_4, %c0_5, %c0_6] : memref<2x4x2x128xf32, #tpu.memory_space<vmem>>, vector<2x4x2x128xf32>
    %cst = arith.constant dense<0xFF800000> : vector<2x2x128xf32>
    %2 = vector.multi_reduction <maximumf>, %0, %cst [1] : vector<2x4x2x128xf32> to vector<2x2x128xf32>
    %3 = vector.shape_cast %2 : vector<2x2x128xf32> to vector<2x1x2x128xf32>
    %4 = vector.broadcast %3 : vector<2x1x2x128xf32> to vector<2x4x2x128xf32>
    %5 = arith.subf %0, %4 : vector<2x4x2x128xf32>
    %6 = math.exp %5 : vector<2x4x2x128xf32>
    %cst_7 = arith.constant dense<0.000000e+00> : vector<2x2x128xf32>
    %7 = vector.multi_reduction <add>, %6, %cst_7 [1] : vector<2x4x2x128xf32> to vector<2x2x128xf32>
    %8 = vector.shape_cast %7 : vector<2x2x128xf32> to vector<2x1x2x128xf32>
    %9 = vector.broadcast %8 : vector<2x1x2x128xf32> to vector<2x4x2x128xf32>
    %10 = arith.divf %6, %9 : vector<2x4x2x128xf32>
    %cst_8 = arith.constant dense<0xFF800000> : vector<2x2x128xf32>
    %11 = vector.multi_reduction <maximumf>, %1, %cst_8 [1] : vector<2x4x2x128xf32> to vector<2x2x128xf32>
    %12 = vector.shape_cast %11 : vector<2x2x128xf32> to vector<2x1x2x128xf32>
    %13 = vector.broadcast %12 : vector<2x1x2x128xf32> to vector<2x4x2x128xf32>
    %14 = arith.subf %1, %13 : vector<2x4x2x128xf32>
    %15 = math.exp %14 : vector<2x4x2x128xf32>
    %cst_9 = arith.constant dense<0.000000e+00> : vector<2x2x128xf32>
    %16 = vector.multi_reduction <add>, %15, %cst_9 [1] : vector<2x4x2x128xf32> to vector<2x2x128xf32>
    %17 = vector.shape_cast %16 : vector<2x2x128xf32> to vector<2x1x2x128xf32>
    %18 = vector.broadcast %17 : vector<2x1x2x128xf32> to vector<2x4x2x128xf32>
    %19 = arith.divf %15, %18 : vector<2x4x2x128xf32>
    %20 = arith.subf %10, %19 : vector<2x4x2x128xf32>
    %21 = arith.mulf %20, %20 : vector<2x4x2x128xf32>
    %c0_10 = arith.constant 0 : index
    %c0_11 = arith.constant 0 : index
    %c0_12 = arith.constant 0 : index
    %c0_13 = arith.constant 0 : index
    %22 = vector.load %arg4[%c0_10, %c0_11, %c0_12, %c0_13] : memref<2x4x2x128xf32, #tpu.memory_space<vmem>>, vector<2x4x2x128xf32>
    tpu.vector_store %arg4[%c0_10, %c0_11, %c0_12, %c0_13], %21 {strides = array<i32>} : memref<2x4x2x128xf32, #tpu.memory_space<vmem>>, vector<2x4x2x128xf32>,
    return
  }
  func.func @transform_0(%arg0: i32, %arg1: i32) -> (i32, i32, i32, i32) {
    %c0_i32 = arith.constant 0 : i32
    %c0_i32_0 = arith.constant 0 : i32
    %c0_i32_1 = arith.constant 0 : i32
    return %arg0, %c0_i32, %arg1, %c0_i32_0 : i32, i32, i32, i32
  }
  func.func @transform_1(%arg0: i32, %arg1: i32) -> (i32, i32, i32, i32) {
    %c0_i32 = arith.constant 0 : i32
    %c0_i32_0 = arith.constant 0 : i32
    %c0_i32_1 = arith.constant 0 : i32
    return %arg0, %c0_i32, %arg1, %c0_i32_0 : i32, i32, i32, i32
  }
  func.func @transform_2(%arg0: i32, %arg1: i32) -> (i32, i32, i32, i32) {
    %c0_i32 = arith.constant 0 : i32
    %c0_i32_0 = arith.constant 0 : i32
    %c0_i32_1 = arith.constant 0 : i32
    return %arg0, %c0_i32, %arg1, %c0_i32_0 : i32, i32, i32, i32
  }
}

</mosaic_0001>

<llo_original>
// kernel: consistency_loss.1
$region0: #{consistency_loss.1}
  #allocation0 [shape = 'u32[]', space=smem, size = 0x4, offset = 0x4, fixed_abs, tag = 'smem constant byte address 0x4 - core index']
  #allocation1 [shape = 'u32[144,128]{1,0:T(1,128)}', space=vmem, size = 0x12000, scoped, tag = 'internal scratch']
  %s0 = inlined_call_operand.vmem [shape: f32[2,4,2,128], index: 0, kind: input, shape index: {}]
  %s1 = inlined_call_operand.vmem [shape: f32[2,4,2,128], index: 1, kind: input, shape index: {}]
  %s2 = inlined_call_operand.vmem [shape: f32[2,4,2,128], index: 2, kind: output, shape index: {}]
  %s3 = sld [smem:[#allocation0]]
  $region18: #{consistency_loss.1} parent=0
    _
  %s5 = ssub.s32 1, %s3
  %s6 = scalar_select 0, %s5, %s3
  // Predicated region
  $region2: #{consistency_loss.1} parent=0 // pred_check
    _
  $region3: #{consistency_loss.1} parent=0 // pred_check_branch
    %8 = sbr.rel (0) target = $region5
  $region4: #{consistency_loss.1} parent=0 // pred_region
    _
  $region5: #{consistency_loss.1} parent=0 // pred_fallthru
    _
  // Predicated region
  $region6: #{consistency_loss.1} parent=0 // pred_check
    _
  $region7: #{consistency_loss.1} parent=0 // pred_check_branch
    %10 = sbr.rel (0) target = $region9
  $region8: #{consistency_loss.1} parent=0 // pred_region
    _
  $region9: #{consistency_loss.1} parent=0 // pred_fallthru
    _
  %v11 = vld [vmem:[%s0] sm:$0x3]
  %v12 = vld [vmem:[%s0 + $0x2] sm:$0x3]
  %v13 = vld [vmem:[%s0 + $0x4] sm:$0x3]
  %v14 = vld [vmem:[%s0 + $0x6] sm:$0x3]
  %v15 = vld [vmem:[%s0 + $0x8] sm:$0x3]
  %v16 = vld [vmem:[%s0 + $0xa] sm:$0x3]
  %v17 = vld [vmem:[%s0 + $0xc] sm:$0x3]
  %v18 = vld [vmem:[%s0 + $0xe] sm:$0x3]
  %v19 = vld [vmem:[%s1] sm:$0x3]
  %v20 = vld [vmem:[%s1 + $0x2] sm:$0x3]
  %v21 = vld [vmem:[%s1 + $0x4] sm:$0x3]
  %v22 = vld [vmem:[%s1 + $0x6] sm:$0x3]
  %v23 = vld [vmem:[%s1 + $0x8] sm:$0x3]
  %v24 = vld [vmem:[%s1 + $0xa] sm:$0x3]
  %v25 = vld [vmem:[%s1 + $0xc] sm:$0x3]
  %v26 = vld [vmem:[%s1 + $0xe] sm:$0x3]
  %vm27 = vcmask 1041408
  %v28 = vsel %vm27, %v11, -inf
  %v29 = vsel %vm27, %v12, -inf
  %v30 = vsel %vm27, %v13, -inf
  %v31 = vmax.f32 %v28, %v30
  %v32 = vsel %vm27, %v14, -inf
  %v33 = vmax.f32 %v29, %v32
  %v34 = vmax.f32 %v31, %v33
  %v35 = vsel %vm27, %v15, -inf
  %v36 = vsel %vm27, %v16, -inf
  %v37 = vsel %vm27, %v17, -inf
  %v38 = vmax.f32 %v35, %v37
  %v39 = vsel %vm27, %v18, -inf
  %v40 = vmax.f32 %v36, %v39
  %v41 = vmax.f32 %v38, %v40
  %v42 = vsub.f32 %v11, %v34
  %v43 = vsub.f32 %v12, %v34
  %v44 = vsub.f32 %v13, %v34
  %v45 = vsub.f32 %v14, %v34
  %v46 = vsub.f32 %v15, %v41
  %v47 = vsub.f32 %v16, %v41
  %v48 = vsub.f32 %v17, %v41
  %v49 = vsub.f32 %v18, %v41
  %v50 = vmul.f32 %v42, 1.442695
  %v51 = vpow.pop %v50
  %v52 = vmul.f32 %v43, 1.442695
  %v53 = vpow.pop %v52
  %v54 = vmul.f32 %v44, 1.442695
  %v55 = vpow.pop %v54
  %v56 = vmul.f32 %v45, 1.442695
  %v57 = vpow.pop %v56
  %v58 = vmul.f32 %v46, 1.442695
  %v59 = vpow.pop %v58
  %v60 = vmul.f32 %v47, 1.442695
  %v61 = vpow.pop %v60
  %v62 = vmul.f32 %v48, 1.442695
  %v63 = vpow.pop %v62
  %v64 = vmul.f32 %v49, 1.442695
  %v65 = vpow.pop %v64
  %v66 = vsel %vm27, %v51, 0.0
  %v67 = vsel %vm27, %v53, 0.0
  %v68 = vadd.f32 %v66, %v67
  %v69 = vsel %vm27, %v55, 0.0
  %v70 = vadd.f32 %v68, %v69
  %v71 = vsel %vm27, %v57, 0.0
  %v72 = vadd.f32 %v70, %v71
  %v73 = vsel %vm27, %v59, 0.0
  %v74 = vsel %vm27, %v61, 0.0
  %v75 = vadd.f32 %v73, %v74
  %v76 = vsel %vm27, %v63, 0.0
  %v77 = vadd.f32 %v75, %v76
  %v78 = vsel %vm27, %v65, 0.0
  %v79 = vadd.f32 %v77, %v78
  %v80 = vrcp.pop %v72
  %v81 = vmul.f32 %v51, %v80
  %v82 = vmul.f32 %v53, %v80
  %v83 = vmul.f32 %v55, %v80
  %v84 = vmul.f32 %v57, %v80
  %v85 = vrcp.pop %v79
  %v86 = vmul.f32 %v59, %v85
  %v87 = vmul.f32 %v61, %v85
  %v88 = vmul.f32 %v63, %v85
  %v89 = vmul.f32 %v65, %v85
  %v90 = vsel %vm27, %v19, -inf
  %v91 = vsel %vm27, %v20, -inf
  %v92 = vsel %vm27, %v21, -inf
  %v93 = vmax.f32 %v90, %v92
  %v94 = vsel %vm27, %v22, -inf
  %v95 = vmax.f32 %v91, %v94
  %v96 = vmax.f32 %v93, %v95
  %v97 = vsel %vm27, %v23, -inf
  %v98 = vsel %vm27, %v24, -inf
  %v99 = vsel %vm27, %v25, -inf
  %v100 = vmax.f32 %v97, %v99
  %v101 = vsel %vm27, %v26, -inf
  %v102 = vmax.f32 %v98, %v101
  %v103 = vmax.f32 %v100, %v102
  %v104 = vsub.f32 %v19, %v96
  %v105 = vsub.f32 %v20, %v96
  %v106 = vsub.f32 %v21, %v96
  %v107 = vsub.f32 %v22, %v96
  %v108 = vsub.f32 %v23, %v103
  %v109 = vsub.f32 %v24, %v103
  %v110 = vsub.f32 %v25, %v103
  %v111 = vsub.f32 %v26, %v103
  %v112 = vmul.f32 %v104, 1.442695
  %v113 = vpow.pop %v112
  %v114 = vmul.f32 %v105, 1.442695
  %v115 = vpow.pop %v114
  %v116 = vmul.f32 %v106, 1.442695
  %v117 = vpow.pop %v116
  %v118 = vmul.f32 %v107, 1.442695
  %v119 = vpow.pop %v118
  %v120 = vmul.f32 %v108, 1.442695
  %v121 = vpow.pop %v120
  %v122 = vmul.f32 %v109, 1.442695
  %v123 = vpow.pop %v122
  %v124 = vmul.f32 %v110, 1.442695
  %v125 = vpow.pop %v124
  %v126 = vmul.f32 %v111, 1.442695
  %v127 = vpow.pop %v126
  %v128 = vsel %vm27, %v113, 0.0
  %v129 = vsel %vm27, %v115, 0.0
  %v130 = vadd.f32 %v128, %v129
  %v131 = vsel %vm27, %v117, 0.0
  %v132 = vadd.f32 %v130, %v131
  %v133 = vsel %vm27, %v119, 0.0
  %v134 = vadd.f32 %v132, %v133
  %v135 = vsel %vm27, %v121, 0.0
  %v136 = vsel %vm27, %v123, 0.0
  %v137 = vadd.f32 %v135, %v136
  %v138 = vsel %vm27, %v125, 0.0
  %v139 = vadd.f32 %v137, %v138
  %v140 = vsel %vm27, %v127, 0.0
  %v141 = vadd.f32 %v139, %v140
  %v142 = vrcp.pop %v134
  %v143 = vmul.f32 %v113, %v142
  %v144 = vmul.f32 %v115, %v142
  %v145 = vmul.f32 %v117, %v142
  %v146 = vmul.f32 %v119, %v142
  %v147 = vrcp.pop %v141
  %v148 = vmul.f32 %v121, %v147
  %v149 = vmul.f32 %v123, %v147
  %v150 = vmul.f32 %v125, %v147
  %v151 = vmul.f32 %v127, %v147
  %v152 = vsub.f32 %v81, %v143
  %v153 = vsub.f32 %v82, %v144
  %v154 = vsub.f32 %v83, %v145
  %v155 = vsub.f32 %v84, %v146
  %v156 = vsub.f32 %v86, %v148
  %v157 = vsub.f32 %v87, %v149
  %v158 = vsub.f32 %v88, %v150
  %v159 = vsub.f32 %v89, %v151
  %v160 = vmul.f32 %v152, %v152
  %v161 = vmul.f32 %v153, %v153
  %v162 = vmul.f32 %v154, %v154
  %v163 = vmul.f32 %v155, %v155
  %v164 = vmul.f32 %v156, %v156
  %v165 = vmul.f32 %v157, %v157
  %v166 = vmul.f32 %v158, %v158
  %v167 = vmul.f32 %v159, %v159
  %168 = vst [vmem:[%s2] sm:$0x3] %v160
  %169 = vst [vmem:[%s2 + $0x2] sm:$0x3] %v161
  %170 = vst [vmem:[%s2 + $0x4] sm:$0x3] %v162
  %171 = vst [vmem:[%s2 + $0x6] sm:$0x3] %v163
  %172 = vst [vmem:[%s2 + $0x8] sm:$0x3] %v164
  %173 = vst [vmem:[%s2 + $0xa] sm:$0x3] %v165
  %174 = vst [vmem:[%s2 + $0xc] sm:$0x3] %v166
  %175 = vst [vmem:[%s2 + $0xe] sm:$0x3] %v167
  // Predicated region
  $region10: #{consistency_loss.1} parent=0 // pred_check
    _
  $region11: #{consistency_loss.1} parent=0 // pred_check_branch
    %177 = sbr.rel (0) target = $region13
  $region12: #{consistency_loss.1} parent=0 // pred_region
    _
  $region13: #{consistency_loss.1} parent=0 // pred_fallthru
    _
  // Predicated region
  $region14: #{consistency_loss.1} parent=0 // pred_check
    _
  $region15: #{consistency_loss.1} parent=0 // pred_check_branch
    %179 = sbr.rel (0) target = $region17
  $region16: #{consistency_loss.1} parent=0 // pred_region
    _
  $region17: #{consistency_loss.1} parent=0 // pred_fallthru
    _

</llo_original>
